<compile_context>
chip_gen: v6e
topology: v6e:2x2x1
jax: 0.10.0
libtpu: 0.0.40
codegen_flags: <defaults>
</compile_context>

<pallas_src>
import functools

import jax
import jax.numpy as jnp
from jax.experimental import pallas as pl
from jax.experimental.pallas import tpu as pltpu

HIDDEN = 64  # nn.Linear(input_size, 64)


def _dropout_mlp_kernel(x_ref, w_ref, b_ref, bits_ref, o_ref, *, drop_threshold):
    # Linear: y = x @ W^T + b, contracting K on both operands (no transpose
    # materialization -- MXU handles trans_b natively).
    y = jax.lax.dot_general(
        x_ref[...],
        w_ref[...],
        dimension_numbers=(((1,), (1,)), ((), ())),
        preferred_element_type=jnp.float32,
    )
    y = y + b_ref[...]          # b_ref is (1, HIDDEN), broadcasts over rows
    y = jnp.maximum(y, 0.0)     # ReLU

    # Fused dropout stack: single Bernoulli(keep = prod(1 - p_i)) mask via an
    # integer-threshold compare on raw uint32 random bits.  The 1/p_keep scale
    # is already folded into W and b by the wrapper.
    if drop_threshold > 0:
        keep = bits_ref[...] >= jnp.uint32(drop_threshold)
        y = jnp.where(keep, y, 0.0)

    o_ref[...] = y.astype(o_ref.dtype)


def _pick_batch_tile(batch):
    # Biggest power-of-two tile (<= 1024 rows) that divides the batch; a
    # 1024x(K+64) f32 tile double-buffered stays well under v7x's 32 MiB
    # scoped-VMEM default.  Fall back to a single full block for tiny/odd B.
    for tb in (1024, 512, 256, 128, 64, 32, 16, 8):
        if batch % tb == 0:
            return tb
    return batch


def dropout_model_forward(x, weight, bias, dropout_key, dropout_rates):
    """x: (B, K) f32, weight: (64, K) f32 (torch Linear layout), bias: (64,) f32."""
    batch, k = x.shape
    assert weight.shape == (HIDDEN, k)
    assert bias.shape == (HIDDEN,)

    # Fuse the dropout stack: keep prob = prod(1 - p_i), survivor scale = 1/keep.
    p_keep = 1.0
    for p in dropout_rates:
        p = float(p)
        assert 0.0 <= p <= 1.0
        p_keep *= (1.0 - p)
    if p_keep <= 0.0:
        # Some Dropout(p=1.0) in the stack: output is identically zero.
        return jnp.zeros((batch, HIDDEN), jnp.float32)

    scale = 1.0 / p_keep
    p_drop = 1.0 - p_keep
    drop_threshold = min(int(round(p_drop * float(2**32))), 2**32 - 1)

    # Fold the deterministic survivor scale into the linear layer
    # (scale > 0 commutes with ReLU and with the 0/keep mask).
    w_scaled = (weight * jnp.float32(scale)).astype(jnp.float32)
    b_scaled = (bias * jnp.float32(scale)).reshape(1, HIDDEN).astype(jnp.float32)

    # One uint32 random word per output element (independent per batch row,
    # so tiling the batch never correlates masks across tiles).
    bits = jax.random.bits(dropout_key, (batch, HIDDEN), dtype=jnp.uint32)

    tb = _pick_batch_tile(batch)
    grid = (pl.cdiv(batch, tb),)

    kernel = functools.partial(_dropout_mlp_kernel, drop_threshold=drop_threshold)

    cost = pl.CostEstimate(
        flops=2 * batch * HIDDEN * k,
        transcendentals=0,
        bytes_accessed=4 * (batch * k + HIDDEN * k + HIDDEN
                            + batch * HIDDEN   # bits
                            + batch * HIDDEN),  # out
    )

    return pl.pallas_call(
        kernel,
        out_shape=jax.ShapeDtypeStruct((batch, HIDDEN), jnp.float32),
        grid=grid,
        in_specs=[
            pl.BlockSpec((tb, k), lambda i: (i, 0)),            # x tile
            pl.BlockSpec((HIDDEN, k), lambda i: (0, 0)),        # weight (resident)
            pl.BlockSpec((1, HIDDEN), lambda i: (0, 0)),        # bias (resident)
            pl.BlockSpec((tb, HIDDEN), lambda i: (i, 0)),       # random bits tile
        ],
        out_specs=pl.BlockSpec((tb, HIDDEN), lambda i: (i, 0)),
        compiler_params=pltpu.CompilerParams(
            dimension_semantics=("parallel",),
        ),
        cost_estimate=cost,
    )(x, w_scaled, b_scaled, bits)


def init_params(key, input_size):
    """Mimic torch.nn.Linear default init: U[-1/sqrt(fan_in), 1/sqrt(fan_in)]."""
    kw, kb = jax.random.split(key)
    bound = 1.0 / jnp.sqrt(jnp.float32(input_size))
    weight = jax.random.uniform(
        kw, (HIDDEN, input_size), jnp.float32, minval=-bound, maxval=bound
    )
    bias = jax.random.uniform(
        kb, (HIDDEN,), jnp.float32, minval=-bound, maxval=bound
    )
    return weight, bias


if __name__ == "__main__":
    key = jax.random.PRNGKey(0)
    k_x, k_p, k_drop = jax.random.split(key, 3)

    input_size = 32
    batch = 16
    layer_num = 3
    dropout_rates = [0.1, 0.2, 0.3]  # len == layer_num, matching the module assert

    x = jax.random.normal(k_x, (batch, input_size), jnp.float32)
    weight, bias = init_params(k_p, input_size)

    out = dropout_model_forward(x, weight, bias, k_drop, dropout_rates)
    out = jax.block_until_ready(out)

    assert out.shape == (batch, HIDDEN)
    assert out.dtype == jnp.float32
    assert bool(jnp.all(jnp.isfinite(out)))
    print("KERNEL_OK")
</pallas_src>

<mosaic_0001>
module attributes {stable_mosaic.version = 11 : i64} {
  func.func @_dropout_mlp_kernel(%arg0: i32, %arg1: memref<16x32xf32, #tpu.memory_space<vmem>>, %arg2: memref<64x32xf32, #tpu.memory_space<vmem>>, %arg3: memref<1x64xf32, #tpu.memory_space<vmem>>, %arg4: memref<16x64xi32, #tpu.memory_space<vmem>>, %arg5: memref<16x64xf32, #tpu.memory_space<vmem>>) attributes {dimension_semantics = [#tpu.dimension_semantics<parallel>], iteration_bounds = array<i64: 1>, scalar_prefetch = 0 : i64, scratch_operands = 0 : i64, tpu.core_type = #tpu.core_type<tc>, window_params = [{transform_indices = @transform_0, window_bounds = array<i64: 16, 32>}, {pipeline_mode = #tpu.pipeline_mode<synchronous>, transform_indices = @transform_1, window_bounds = array<i64: 64, 32>}, {pipeline_mode = #tpu.pipeline_mode<synchronous>, transform_indices = @transform_2, window_bounds = array<i64: 1, 64>}, {transform_indices = @transform_3, window_bounds = array<i64: 16, 64>}, {transform_indices = @transform_4, window_bounds = array<i64: 16, 64>}]} {
    %c0 = arith.constant 0 : index
    %c0_0 = arith.constant 0 : index
    %0 = vector.load %arg1[%c0, %c0_0] : memref<16x32xf32, #tpu.memory_space<vmem>>, vector<16x32xf32>
    %c0_1 = arith.constant 0 : index
    %c0_2 = arith.constant 0 : index
    %1 = vector.load %arg2[%c0_1, %c0_2] : memref<64x32xf32, #tpu.memory_space<vmem>>, vector<64x32xf32>
    %cst = arith.constant dense<0.000000e+00> : vector<16x64xf32>
    %2 = tpu.matmul %0, %1, %cst {dimension_numbers = #tpu.dot_dimension_numbers<[1], [1], [0], [0], [0, 0, 1, 0], [], []>} : vector<16x32xf32>, vector<64x32xf32>, vector<16x64xf32> -> vector<16x64xf32>
    %c0_3 = arith.constant 0 : index
    %c0_4 = arith.constant 0 : index
    %3 = vector.load %arg3[%c0_3, %c0_4] : memref<1x64xf32, #tpu.memory_space<vmem>>, vector<1x64xf32>
    %4 = vector.broadcast %3 : vector<1x64xf32> to vector<16x64xf32>
    %5 = arith.addf %2, %4 : vector<16x64xf32>
    %cst_5 = arith.constant 0.000000e+00 : f32
    %6 = vector.broadcast %cst_5 : f32 to vector<16x64xf32>
    %7 = arith.maximumf %5, %6 : vector<16x64xf32>
    %c0_6 = arith.constant 0 : index
    %c0_7 = arith.constant 0 : index
    %8 = vector.load %arg4[%c0_6, %c0_7] : memref<16x64xi32, #tpu.memory_space<vmem>>, vector<16x64xi32>
    %c2130303779_i32 = arith.constant 2130303779 : i32
    %9 = vector.broadcast %c2130303779_i32 : i32 to vector<16x64xi32>
    %10 = arith.cmpi uge, %8, %9 : vector<16x64xi32>
    %cst_8 = arith.constant 0.000000e+00 : f32
    %11 = vector.broadcast %cst_8 : f32 to vector<16x64xf32>
    %12 = arith.select %10, %7, %11 : vector<16x64xi1>, vector<16x64xf32>
    %c0_9 = arith.constant 0 : index
    %c0_10 = arith.constant 0 : index
    %13 = vector.load %arg5[%c0_9, %c0_10] : memref<16x64xf32, #tpu.memory_space<vmem>>, vector<16x64xf32>
    tpu.vector_store %arg5[%c0_9, %c0_10], %12 {strides = array<i32>} : memref<16x64xf32, #tpu.memory_space<vmem>>, vector<16x64xf32>,
    return
  }
  func.func @transform_0(%arg0: i32) -> (i32, i32) {
    %c0_i32 = arith.constant 0 : i32
    %c0_i32_0 = arith.constant 0 : i32
    return %arg0, %c0_i32 : i32, i32
  }
  func.func @transform_1(%arg0: i32) -> (i32, i32) {
    %c0_i32 = arith.constant 0 : i32
    %c0_i32_0 = arith.constant 0 : i32
    %c0_i32_1 = arith.constant 0 : i32
    return %c0_i32, %c0_i32_0 : i32, i32
  }
  func.func @transform_2(%arg0: i32) -> (i32, i32) {
    %c0_i32 = arith.constant 0 : i32
    %c0_i32_0 = arith.constant 0 : i32
    %c0_i32_1 = arith.constant 0 : i32
    return %c0_i32, %c0_i32_0 : i32, i32
  }
  func.func @transform_3(%arg0: i32) -> (i32, i32) {
    %c0_i32 = arith.constant 0 : i32
    %c0_i32_0 = arith.constant 0 : i32
    return %arg0, %c0_i32 : i32, i32
  }
  func.func @transform_4(%arg0: i32) -> (i32, i32) {
    %c0_i32 = arith.constant 0 : i32
    %c0_i32_0 = arith.constant 0 : i32
    return %arg0, %c0_i32 : i32, i32
  }
}

</mosaic_0001>

<llo_original>
// kernel: tpu_custom_call.1
$region0: #{tpu_custom_call.1}
  #allocation0 [shape = 'u32[]', space=smem, size = 0x4, offset = 0x4, fixed_abs, tag = 'smem constant byte address 0x4 - core index']
  #allocation1 [shape = 'u32[144,128]{1,0:T(1,128)}', space=vmem, size = 0x12000, scoped, tag = 'internal scratch']
  %s0 = inlined_call_operand.vmem [shape: f32[16,32], index: 0, kind: input, shape index: {}]
  %s1 = inlined_call_operand.vmem [shape: f32[64,32], index: 1, kind: input, shape index: {}]
  %s2 = inlined_call_operand.vmem [shape: f32[1,64], index: 2, kind: input, shape index: {}]
  %s3 = inlined_call_operand.vmem [shape: u32[16,64], index: 3, kind: input, shape index: {}]
  %s4 = inlined_call_operand.hbm [shape: f32[16,64], index: 4, kind: output, shape index: {}]
  %s5 = sld [smem:[#allocation0]]
  $region26: #{tpu_custom_call.1} parent=0
    _
  %s7 = ssub.s32 1, %s5
  %s8 = scalar_select 0, %s7, %s5
  $region1: #{tpu_custom_call.1} parent=0
    #allocation2 [shape = 'u8[8192]{0}', space=vmem, size = 0x2000, scoped, tag = 'output window, operand 0, single buffered']
    #allocation3 [shape = 's32[1]{0}', space=sflag, size = 0x4, scoped, tag = 'scoped memory for tpu_custom_call.1']
    %9 = vsyncpa [#allocation3], 0
    // Predicated region
    $region2: #{tpu_custom_call.1} parent=1 // pred_check
      _
    $region3: #{tpu_custom_call.1} parent=1 // pred_check_branch
      %11 = sbr.rel (0) target = $region5
    $region4: #{tpu_custom_call.1} parent=1 // pred_region
      _
    $region5: #{tpu_custom_call.1} parent=1 // pred_fallthru
      _
    // Predicated region
    $region6: #{tpu_custom_call.1} parent=1 // pred_check
      _
    $region7: #{tpu_custom_call.1} parent=1 // pred_check_branch
      %13 = sbr.rel (0) target = $region9
    $region8: #{tpu_custom_call.1} parent=1 // pred_region
      _
    $region9: #{tpu_custom_call.1} parent=1 // pred_fallthru
      _
    // Predicated region
    $region10: #{tpu_custom_call.1} parent=1 // pred_check
      _
    $region11: #{tpu_custom_call.1} parent=1 // pred_check_branch
      %15 = sbr.rel (0) target = $region13
    $region12: #{tpu_custom_call.1} parent=1 // pred_region
      _
    $region13: #{tpu_custom_call.1} parent=1 // pred_fallthru
      _
    // Predicated region
    $region14: #{tpu_custom_call.1} parent=1 // pred_check
      _
    $region15: #{tpu_custom_call.1} parent=1 // pred_check_branch
      %17 = sbr.rel (0) target = $region17
    $region16: #{tpu_custom_call.1} parent=1 // pred_region
      _
    $region17: #{tpu_custom_call.1} parent=1 // pred_fallthru
      _
    %v18 = vld [vmem:[%s0] sm:$0xff]
    %v19 = vld [vmem:[%s0 + $0x8] sm:$0xff]
    %v20 = vld [vmem:[%s1] sm:$0xff]
    %v21 = vld [vmem:[%s1 + $0x8] sm:$0xff]
    %v22 = vld [vmem:[%s1 + $0x10] sm:$0xff]
    %v23 = vld [vmem:[%s1 + $0x18] sm:$0xff]
    %v24 = vld [vmem:[%s1 + $0x20] sm:$0xff]
    %v25 = vld [vmem:[%s1 + $0x28] sm:$0xff]
    %v26 = vld [vmem:[%s1 + $0x30] sm:$0xff]
    %v27 = vld [vmem:[%s1 + $0x38] sm:$0xff]
    %v28 = vld [vmem:[%s2] sm:$0x1]
    %v30 = vlaneseq
    %v31 = vshrl.u32 %v30, 7
    %v32 = vsub.s32 0, %v31
    %v33 = vrot.slane %v28, %v32
    %vm35 = vcmask 261120
    %v37 = vsel %vm35, %v18, 0
    %v40 = vsel %vm35, %v19, 0
    %v43 = vsel %vm35, %v20, 0
    %v46 = vsel %vm35, %v21, 0
    %v49 = vsel %vm35, %v22, 0
    %v52 = vsel %vm35, %v23, 0
    %v55 = vsel %vm35, %v24, 0
    %v58 = vsel %vm35, %v25, 0
    %v61 = vsel %vm35, %v26, 0
    %v64 = vsel %vm35, %v27, 0
    %66 = vmatprep.subr.mxu0 0.0
    %67 = vmatpush1.xpose.msra.mxu0 0.0
    %68 = vmatprep.subr.mxu0 0.0
    %69 = vmatpush1.xpose.msra.mxu0 0.0
    %70 = vmatprep.subr.mxu0 0.0
    %71 = vmatpush1.xpose.msra.mxu0 0.0
    %72 = vmatprep.subr.mxu0 0.0
    %73 = vmatpush1.xpose.msra.mxu0 0.0
    %74 = vmatprep.subr.mxu0 0.0
    %75 = vmatpush1.xpose.msra.mxu0 0.0
    %76 = vmatprep.subr.mxu0 0.0
    %77 = vmatpush1.xpose.msra.mxu0 0.0
    %78 = vmatprep.subr.mxu0 0.0
    %79 = vmatpush1.xpose.msra.mxu0 0.0
    %80 = vmatprep.subr.mxu0 0.0
    %81 = vmatpush1.xpose.msra.mxu0 0.0
    %82 = vmatprep.subr.mxu0 0.0
    %83 = vmatpush1.xpose.msra.mxu0 %v64
    %84 = vmatprep.subr.mxu0 0.0
    %85 = vmatpush1.xpose.msra.mxu0 %v61
    %86 = vmatprep.subr.mxu0 0.0
    %87 = vmatpush1.xpose.msra.mxu0 %v58
    %88 = vmatprep.subr.mxu0 0.0
    %89 = vmatpush1.xpose.msra.mxu0 %v55
    %90 = vmatprep.subr.mxu0 0.0
    %91 = vmatpush1.xpose.msra.mxu0 %v52
    %92 = vmatprep.subr.mxu0 0.0
    %93 = vmatpush1.xpose.msra.mxu0 %v49
    %94 = vmatprep.subr.mxu0 0.0
    %95 = vmatpush1.xpose.msra.mxu0 %v46
    %96 = vmatprep.subr.mxu0 0.0
    %97 = vmatpush1.xpose.msra.mxu0 %v43
    %98 = vmatprep.subr.mxu0 0.0
    %99 = vmatpush2.xpose.msra.mxu0 0.0
    %100 = vmatprep.subr.mxu0 0.0
    %101 = vmatpush2.xpose.msra.mxu0 0.0
    %102 = vmatprep.subr.mxu0 0.0
    %103 = vmatpush2.xpose.msra.mxu0 0.0
    %104 = vmatprep.subr.mxu0 0.0
    %105 = vmatpush2.xpose.msra.mxu0 0.0
    %106 = vmatprep.subr.mxu0 0.0
    %107 = vmatpush2.xpose.msra.mxu0 0.0
    %108 = vmatprep.subr.mxu0 0.0
    %109 = vmatpush2.xpose.msra.mxu0 0.0
    %110 = vmatprep.subr.mxu0 0.0
    %111 = vmatpush2.xpose.msra.mxu0 0.0
    %112 = vmatprep.subr.mxu0 0.0
    %113 = vmatpush2.xpose.msra.mxu0 0.0
    %114 = vmatprep.subr.mxu0 0.0
    %115 = vmatpush2.xpose.msra.mxu0 0.0
    %116 = vmatprep.subr.mxu0 0.0
    %117 = vmatpush2.xpose.msra.mxu0 0.0
    %118 = vmatprep.subr.mxu0 0.0
    %119 = vmatpush2.xpose.msra.mxu0 0.0
    %120 = vmatprep.subr.mxu0 0.0
    %121 = vmatpush2.xpose.msra.mxu0 0.0
    %122 = vmatprep.subr.mxu0 0.0
    %123 = vmatpush2.xpose.msra.mxu0 0.0
    %124 = vmatprep.subr.mxu0 0.0
    %125 = vmatpush2.xpose.msra.mxu0 0.0
    %126 = vmatprep.subr.mxu0 0.0
    %127 = vmatpush2.xpose.msra.mxu0 0.0
    %128 = vmatprep.subr.mxu0 0.0
    %129 = vmatpush2.xpose.msra.mxu0 0.0
    %130 = vmatprep.mubr.f32.mxu0 0.0
    %131 = vmatmul.mubr.f32.gmra.mxu0 %v37
    %v132 = vpop.f32.mrf.mxu0
    %v133 = vadd.f32 %v33, %v132
    %v134 = vpop.f32.mrf.mxu0
    %135 = vmatprep.mubr.f32.mxu0 0.0
    %136 = vmatmul.mubr.f32.gmra.mxu0 %v40
    %v137 = vpop.f32.mrf.mxu0
    %v138 = vadd.f32 %v33, %v137
    %v139 = vpop.f32.mrf.mxu0
    %140 = vdwg.mxu0
    %v141 = vmax.f32 %v133, 0.0
    %v142 = vmax.f32 %v138, 0.0
    %v143 = vld [vmem:[%s3] sm:$0xff]
    %v144 = vld [vmem:[%s3 + $0x8] sm:$0xff]
    %vm145 = vcmp.ge.u32.totalorder %v143, 2130303779
    %vm146 = vcmp.ge.u32.totalorder %v144, 2130303779
    %v147 = vsel %vm145, %v141, 0.0
    %v148 = vsel %vm146, %v142, 0.0
    %vm149 = vcmask 523264
    %150 = vst.msk [vmem:[#allocation2] sm:$0xff] %vm149, %v147
    %151 = vst.msk [vmem:[#allocation2 + $0x8] sm:$0xff] %vm149, %v148
    // Predicated region
    $region18: #{tpu_custom_call.1} parent=1 // pred_check
      _
    $region19: #{tpu_custom_call.1} parent=1 // pred_check_branch
      %153 = sbr.rel (0) target = $region21
    $region20: #{tpu_custom_call.1} parent=1 // pred_region
      %s155 = ssub.s32 256, 256
      %156 = vsyncadd [#allocation3], %s155
      %s157 = sshll.u32 [#allocation2], 4
      %s158 = int_to_ptr.vmem [resolvable:$true] %s157
      %163 = dma.vmem_to_hbm [thread:$0]  %s158, 256, %s4, [#allocation3], 128, 128, 8
    $region21: #{tpu_custom_call.1} parent=1 // pred_fallthru
      _
    // Predicated region
    $region22: #{tpu_custom_call.1} parent=1 // pred_check
      _
    $region23: #{tpu_custom_call.1} parent=1 // pred_check_branch
      %165 = sbr.rel (0) target = $region25
    $region24: #{tpu_custom_call.1} parent=1 // pred_region
      %166 = dma.done [#allocation3], 256
    $region25: #{tpu_custom_call.1} parent=1 // pred_fallthru
      _
    %167 = vsyncpa [#allocation3], 1

</llo_original>
